<compile_context>
chip_gen: v6e
topology: v6e:2x2x1
jax: 0.10.0
libtpu: 0.0.40
codegen_flags: <defaults>
</compile_context>

<pallas_src>
import functools

import jax
import jax.numpy as jnp
from jax.experimental import pallas as pl
from jax.experimental.pallas import tpu as pltpu


# ---------------------------------------------------------------------------
# Pallas kernel: patch projection + poolers + fusion + classifier + CE loss
# ---------------------------------------------------------------------------
def _vqa_fused_kernel(
    x_ref,        # [B_pad, Ht+PD]      bf16  [text CLS | mean patch]
    w1_ref,       # [Ht+PD, Hc]         bf16  blockdiag(I_Ht, patch_w)
    b1_ref,       # [1, Hc]             f32   [0 | patch_b]
    pool_w_ref,   # [Hc, Hc]            bf16  blockdiag(pt_w, pi_w)
    pool_b_ref,   # [1, Hc]             f32   [pt_b | pi_b]
    fw_ref,       # [Hc, D]             bf16  fusion Linear weight
    f_b_ref,      # [1, D]              f32   fusion Linear bias
    drop_ref,     # [B_pad, D]          f32   dropout keep-scale (0.0 or 2.0)
    cw_ref,       # [D, L_pad]          bf16  classifier weight (lane-padded)
    cb_ref,       # [1, L_pad]          f32   classifier bias   (lane-padded)
    labels_ref,   # [B_pad, 1]          int32 labels (padded rows arbitrary)
    logits_ref,   # out: [B_pad, L_pad] f32
    loss_ref,     # out: [1, 1]         f32
    *,
    num_rows,     # true batch size  (static)
    num_labels,   # true num_labels  (static)
):
    f32 = jnp.float32
    bf16 = jnp.bfloat16

    # --- stage 1: [text CLS | mean_patch] @ blockdiag(I, patch_w) + [0|patch_b]
    #     == [text CLS | image CLS]  in one MXU op (identity block is free:
    #     K pads to the MXU dimension anyway).
    cls_cat = (
        jnp.dot(x_ref[...], w1_ref[...], preferred_element_type=f32)
        + b1_ref[...]
    )

    # --- BERT/ViT poolers fused into one block-diagonal matmul: tanh(cls @ W + b)
    pooled = jnp.tanh(
        jnp.dot(cls_cat.astype(bf16), pool_w_ref[...], preferred_element_type=f32)
        + pool_b_ref[...]
    )

    # --- fusion = Linear(cat([t_pooled, i_pooled])) -> ReLU -> Dropout(0.5)
    fused = (
        jnp.dot(pooled.astype(bf16), fw_ref[...], preferred_element_type=f32)
        + f_b_ref[...]
    )
    fused = jnp.maximum(fused, 0.0)

    # inverted Dropout(0.5), training mode: keep-scale mask (0.0 / 2.0) was
    # precomputed on the host (jax.random), only ~2 KB of DMA.
    # TODO(synk): eval mode would bypass this multiply entirely.
    fused = fused * drop_ref[...]

    # --- classifier (lane-padded to L_pad so the logits store is unmasked)
    logits = (
        jnp.dot(fused.astype(bf16), cw_ref[...], preferred_element_type=f32)
        + cb_ref[...]
    )
    logits_ref[...] = logits

    # --- CrossEntropyLoss, mean over the TRUE batch rows only,
    #     padded label lanes masked out of the logsumexp.
    b_pad, l_pad = logits.shape
    lane = jax.lax.broadcasted_iota(jnp.int32, (b_pad, l_pad), 1)
    masked = jnp.where(lane < num_labels, logits, jnp.float32(-1e30))
    m = jnp.max(masked, axis=-1, keepdims=True)
    lse = m + jnp.log(jnp.sum(jnp.exp(masked - m), axis=-1, keepdims=True))
    picked = jnp.sum(
        jnp.where(lane == labels_ref[...], logits, 0.0), axis=-1, keepdims=True
    )
    nll = lse - picked                                            # [B_pad, 1]
    row = jax.lax.broadcasted_iota(jnp.int32, (b_pad, 1), 0)
    row_ok = (row < num_rows).astype(f32)
    loss = jnp.sum(nll * row_ok) / jnp.float32(num_rows)
    loss_ref[...] = loss[None, None]


def _round_up(x, m):
    return ((x + m - 1) // m) * m


def vqa_fused_pallas(text_cls, mean_patch, params, labels, seed):
    """text_cls: [B, Ht] f32, mean_patch: [B, patch_dim] f32, labels: [B] int."""
    f32 = jnp.float32
    bf16 = jnp.bfloat16

    B, Ht = text_cls.shape
    patch_dim, Hi = params["patch_w"].shape
    Hc = Ht + Hi
    D = params["f_b"].shape[-1]
    L = params["c_b"].shape[-1]

    B_pad = _round_up(B, 8)       # f32 sublane multiple
    L_pad = _round_up(L, 128)     # lane-dense logits

    # [text CLS | mean patch], batch padded with zero rows
    x = jnp.concatenate([text_cls, mean_patch], axis=-1).astype(f32)
    x = jnp.pad(x, ((0, B_pad - B), (0, 0)))

    labels_p = jnp.pad(labels.astype(jnp.int32), (0, B_pad - B)).reshape(B_pad, 1)

    # stage-1 weight: blockdiag(I_Ht, patch_w); bias [0 | patch_b]
    w1 = jnp.zeros((Ht + patch_dim, Hc), f32)
    w1 = w1.at[:Ht, :Ht].set(jnp.eye(Ht, dtype=f32))
    w1 = w1.at[Ht:, Ht:].set(params["patch_w"])
    b1 = jnp.concatenate(
        [jnp.zeros((1, Ht), f32), params["patch_b"].reshape(1, Hi)], axis=-1
    )

    # block-diagonal pooler weight / concatenated pooler bias
    pool_w = jnp.zeros((Hc, Hc), f32)
    pool_w = pool_w.at[:Ht, :Ht].set(params["pt_w"])
    pool_w = pool_w.at[Ht:, Ht:].set(params["pi_w"])
    pool_b = jnp.concatenate([params["pt_b"], params["pi_b"]], axis=-1)

    # inverted Dropout(0.5) keep-scale: 0.0 (dropped) or 2.0 (kept / (1-p))
    drop_key = jax.random.fold_in(jax.random.PRNGKey(0), seed)
    keep_scale = (
        jax.random.bernoulli(drop_key, 0.5, (B_pad, D)).astype(f32) * 2.0
    )

    # lane-padded classifier
    cw = jnp.pad(params["c_w"], ((0, 0), (0, L_pad - L)))
    cb = jnp.pad(params["c_b"], ((0, 0), (0, L_pad - L)))

    args = (
        x.astype(bf16),
        w1.astype(bf16), b1,
        pool_w.astype(bf16), pool_b,
        params["f_w"].astype(bf16), params["f_b"],
        keep_scale,
        cw.astype(bf16), cb,
        labels_p,
    )

    kernel = functools.partial(_vqa_fused_kernel, num_rows=B, num_labels=L)

    vmem = pl.BlockSpec(memory_space=pltpu.MemorySpace.VMEM)

    logits_pad, loss = pl.pallas_call(
        kernel,
        out_shape=(
            jax.ShapeDtypeStruct((B_pad, L_pad), f32),
            jax.ShapeDtypeStruct((1, 1), f32),
        ),
        in_specs=[vmem] * len(args),
        out_specs=(vmem, vmem),
    )(*args)

    return logits_pad[:B, :L], loss[0, 0]


# ---------------------------------------------------------------------------
# Full forward (tiny glue in plain JAX + everything else in the Pallas kernel)
# ---------------------------------------------------------------------------
def multimodal_vqa_forward(params, input_ids, pixel_values, labels, seed):
    """input_ids: [B, S] int32, pixel_values: [B, C, H, W] f32 (NCHW, like
    PyTorch), labels: [B] int32."""
    # --- stand-in text encoder -------------------------------------------------
    # TODO(synk): pretrained BERT stack not implemented; CLS hidden state
    #             approximated by the token-0 embedding lookup (gather stays in XLA).
    text_cls = params["tok_emb"][input_ids[:, 0]]                 # [B, Ht]

    # --- stand-in image encoder feature ----------------------------------------
    # TODO(synk): pretrained ViT stack not implemented; image CLS approximated by
    #             mean_p(patch_p @ W + b). The projection is affine, so the mean
    #             over patches commutes with it: reduce FIRST over the patch grid
    #             (cheap), then transpose only a tiny [B, C, P, P] tensor, and let
    #             the Pallas kernel do the [B, patch_dim] @ [patch_dim, Hi] matmul.
    B, C, H, W = pixel_values.shape
    P = params["patch_size"]
    x = pixel_values.reshape(B, C, H // P, P, W // P, P)
    x = jnp.mean(x, axis=(2, 4))                                  # [B, C, P, P]
    mean_patch = x.transpose(0, 2, 3, 1).reshape(B, P * P * C)    # (p, q, c) order

    logits, loss = vqa_fused_pallas(text_cls, mean_patch, params, labels, seed)
    return {"logits": logits, "loss": loss}


# ---------------------------------------------------------------------------
# Deterministic parameter init
# ---------------------------------------------------------------------------
def init_params(key, *, vocab=100, text_hidden=32, image_hidden=32,
                intermediate_dim=64, num_labels=8, patch_size=8, channels=3):
    ks = jax.random.split(key, 8)
    patch_dim = patch_size * patch_size * channels
    s = 0.02
    return {
        "patch_size": patch_size,
        "tok_emb": s * jax.random.normal(ks[0], (vocab, text_hidden), jnp.float32),
        "patch_w": s * jax.random.normal(ks[1], (patch_dim, image_hidden), jnp.float32),
        "patch_b": jnp.zeros((image_hidden,), jnp.float32),
        # BERT / ViT poolers
        "pt_w": s * jax.random.normal(ks[2], (text_hidden, text_hidden), jnp.float32),
        "pt_b": jnp.zeros((1, text_hidden), jnp.float32),
        "pi_w": s * jax.random.normal(ks[3], (image_hidden, image_hidden), jnp.float32),
        "pi_b": jnp.zeros((1, image_hidden), jnp.float32),
        # fusion Linear(text_hidden + image_hidden -> intermediate_dim)
        "f_w": s * jax.random.normal(
            ks[4], (text_hidden + image_hidden, intermediate_dim), jnp.float32),
        "f_b": jnp.zeros((1, intermediate_dim), jnp.float32),
        # classifier Linear(intermediate_dim -> num_labels)
        "c_w": s * jax.random.normal(ks[5], (intermediate_dim, num_labels), jnp.float32),
        "c_b": jnp.zeros((1, num_labels), jnp.float32),
    }


if __name__ == "__main__":
    key = jax.random.PRNGKey(0)
    k_param, k_ids, k_px, k_lab = jax.random.split(key, 4)

    B, S = 2, 8
    C, Himg, Wimg = 3, 16, 16
    num_labels = 8

    params = init_params(k_param, num_labels=num_labels)

    input_ids = jax.random.randint(k_ids, (B, S), 0, 100, dtype=jnp.int32)
    pixel_values = jax.random.normal(k_px, (B, C, Himg, Wimg), jnp.float32)  # NCHW
    labels = jax.random.randint(k_lab, (B,), 0, num_labels, dtype=jnp.int32)

    out = multimodal_vqa_forward(params, input_ids, pixel_values, labels, seed=0)
    jax.block_until_ready(out)

    assert out["logits"].shape == (B, num_labels)
    assert out["loss"].shape == ()
    assert bool(jnp.isfinite(out["loss"]))
    print("KERNEL_OK")
</pallas_src>

<mosaic_0001>
module attributes {stable_mosaic.version = 11 : i64} {
  func.func @_vqa_fused_kernel(%arg0: memref<8x224xbf16, #tpu.memory_space<vmem>>, %arg1: memref<224x64xbf16, #tpu.memory_space<vmem>>, %arg2: memref<1x64xf32, #tpu.memory_space<vmem>>, %arg3: memref<64x64xbf16, #tpu.memory_space<vmem>>, %arg4: memref<1x64xf32, #tpu.memory_space<vmem>>, %arg5: memref<64x64xbf16, #tpu.memory_space<vmem>>, %arg6: memref<1x64xf32, #tpu.memory_space<vmem>>, %arg7: memref<8x64xf32, #tpu.memory_space<vmem>>, %arg8: memref<64x128xbf16, #tpu.memory_space<vmem>>, %arg9: memref<1x128xf32, #tpu.memory_space<vmem>>, %arg10: memref<8x1xi32, #tpu.memory_space<vmem>>, %arg11: memref<8x128xf32, #tpu.memory_space<vmem>>, %arg12: memref<1x1xf32, #tpu.memory_space<vmem>>) attributes {dimension_semantics = [], scalar_prefetch = 0 : i64, scratch_operands = 0 : i64, tpu.core_type = #tpu.core_type<tc>} {
    %c0 = arith.constant 0 : index
    %c0_0 = arith.constant 0 : index
    %0 = vector.load %arg0[%c0, %c0_0] : memref<8x224xbf16, #tpu.memory_space<vmem>>, vector<8x224xbf16>
    %c0_1 = arith.constant 0 : index
    %c0_2 = arith.constant 0 : index
    %1 = vector.load %arg1[%c0_1, %c0_2] : memref<224x64xbf16, #tpu.memory_space<vmem>>, vector<224x64xbf16>
    %cst = arith.constant dense<0.000000e+00> : vector<8x64xf32>
    %2 = tpu.matmul %0, %1, %cst {dimension_numbers = #tpu.dot_dimension_numbers<[1], [0], [0], [1], [0, 0, 1, 1], [], []>} : vector<8x224xbf16>, vector<224x64xbf16>, vector<8x64xf32> -> vector<8x64xf32>
    %c0_3 = arith.constant 0 : index
    %c0_4 = arith.constant 0 : index
    %3 = vector.load %arg2[%c0_3, %c0_4] : memref<1x64xf32, #tpu.memory_space<vmem>>, vector<1x64xf32>
    %4 = vector.broadcast %3 : vector<1x64xf32> to vector<8x64xf32>
    %5 = arith.addf %2, %4 : vector<8x64xf32>
    %6 = arith.truncf %5 : vector<8x64xf32> to vector<8x64xbf16>
    %c0_5 = arith.constant 0 : index
    %c0_6 = arith.constant 0 : index
    %7 = vector.load %arg3[%c0_5, %c0_6] : memref<64x64xbf16, #tpu.memory_space<vmem>>, vector<64x64xbf16>
    %cst_7 = arith.constant dense<0.000000e+00> : vector<8x64xf32>
    %8 = tpu.matmul %6, %7, %cst_7 {dimension_numbers = #tpu.dot_dimension_numbers<[1], [0], [0], [1], [0, 0, 1, 1], [], []>} : vector<8x64xbf16>, vector<64x64xbf16>, vector<8x64xf32> -> vector<8x64xf32>
    %c0_8 = arith.constant 0 : index
    %c0_9 = arith.constant 0 : index
    %9 = vector.load %arg4[%c0_8, %c0_9] : memref<1x64xf32, #tpu.memory_space<vmem>>, vector<1x64xf32>
    %10 = vector.broadcast %9 : vector<1x64xf32> to vector<8x64xf32>
    %11 = arith.addf %8, %10 : vector<8x64xf32>
    %12 = math.tanh %11 : vector<8x64xf32>
    %13 = arith.truncf %12 : vector<8x64xf32> to vector<8x64xbf16>
    %c0_10 = arith.constant 0 : index
    %c0_11 = arith.constant 0 : index
    %14 = vector.load %arg5[%c0_10, %c0_11] : memref<64x64xbf16, #tpu.memory_space<vmem>>, vector<64x64xbf16>
    %cst_12 = arith.constant dense<0.000000e+00> : vector<8x64xf32>
    %15 = tpu.matmul %13, %14, %cst_12 {dimension_numbers = #tpu.dot_dimension_numbers<[1], [0], [0], [1], [0, 0, 1, 1], [], []>} : vector<8x64xbf16>, vector<64x64xbf16>, vector<8x64xf32> -> vector<8x64xf32>
    %c0_13 = arith.constant 0 : index
    %c0_14 = arith.constant 0 : index
    %16 = vector.load %arg6[%c0_13, %c0_14] : memref<1x64xf32, #tpu.memory_space<vmem>>, vector<1x64xf32>
    %17 = vector.broadcast %16 : vector<1x64xf32> to vector<8x64xf32>
    %18 = arith.addf %15, %17 : vector<8x64xf32>
    %cst_15 = arith.constant 0.000000e+00 : f32
    %19 = vector.broadcast %cst_15 : f32 to vector<8x64xf32>
    %20 = arith.maximumf %18, %19 : vector<8x64xf32>
    %c0_16 = arith.constant 0 : index
    %c0_17 = arith.constant 0 : index
    %21 = vector.load %arg7[%c0_16, %c0_17] : memref<8x64xf32, #tpu.memory_space<vmem>>, vector<8x64xf32>
    %22 = arith.mulf %20, %21 : vector<8x64xf32>
    %23 = arith.truncf %22 : vector<8x64xf32> to vector<8x64xbf16>
    %c0_18 = arith.constant 0 : index
    %c0_19 = arith.constant 0 : index
    %24 = vector.load %arg8[%c0_18, %c0_19] : memref<64x128xbf16, #tpu.memory_space<vmem>>, vector<64x128xbf16>
    %cst_20 = arith.constant dense<0.000000e+00> : vector<8x128xf32>
    %25 = tpu.matmul %23, %24, %cst_20 {dimension_numbers = #tpu.dot_dimension_numbers<[1], [0], [0], [1], [0, 0, 1, 1], [], []>} : vector<8x64xbf16>, vector<64x128xbf16>, vector<8x128xf32> -> vector<8x128xf32>
    %c0_21 = arith.constant 0 : index
    %c0_22 = arith.constant 0 : index
    %26 = vector.load %arg9[%c0_21, %c0_22] : memref<1x128xf32, #tpu.memory_space<vmem>>, vector<1x128xf32>
    %27 = vector.broadcast %26 : vector<1x128xf32> to vector<8x128xf32>
    %28 = arith.addf %25, %27 : vector<8x128xf32>
    %c0_23 = arith.constant 0 : index
    %c0_24 = arith.constant 0 : index
    %29 = vector.load %arg11[%c0_23, %c0_24] : memref<8x128xf32, #tpu.memory_space<vmem>>, vector<8x128xf32>
    tpu.vector_store %arg11[%c0_23, %c0_24], %28 {strides = array<i32>} : memref<8x128xf32, #tpu.memory_space<vmem>>, vector<8x128xf32>,
    %30 = tpu.iota {dimensions = array<i32: 1>} : vector<8x128xi32>
    %c8_i32 = arith.constant 8 : i32
    %31 = vector.broadcast %c8_i32 : i32 to vector<8x128xi32>
    %32 = arith.cmpi slt, %30, %31 : vector<8x128xi32>
    %cst_25 = arith.constant -1.000000e+30 : f32
    %33 = vector.broadcast %cst_25 : f32 to vector<8x128xf32>
    %34 = arith.select %32, %28, %33 : vector<8x128xi1>, vector<8x128xf32>
    %cst_26 = arith.constant dense<0xFF800000> : vector<8xf32>
    %35 = vector.multi_reduction <maximumf>, %34, %cst_26 [1] : vector<8x128xf32> to vector<8xf32>
    %36 = vector.shape_cast %35 : vector<8xf32> to vector<8x1xf32>
    %37 = vector.broadcast %36 : vector<8x1xf32> to vector<8x128xf32>
    %38 = arith.subf %34, %37 : vector<8x128xf32>
    %39 = math.exp %38 : vector<8x128xf32>
    %cst_27 = arith.constant dense<0.000000e+00> : vector<8xf32>
    %40 = vector.multi_reduction <add>, %39, %cst_27 [1] : vector<8x128xf32> to vector<8xf32>
    %41 = vector.shape_cast %40 : vector<8xf32> to vector<8x1xf32>
    %42 = math.log %41 : vector<8x1xf32>
    %43 = arith.addf %36, %42 : vector<8x1xf32>
    %c0_28 = arith.constant 0 : index
    %c0_29 = arith.constant 0 : index
    %44 = vector.load %arg10[%c0_28, %c0_29] : memref<8x1xi32, #tpu.memory_space<vmem>>, vector<8x1xi32>
    %45 = vector.broadcast %44 : vector<8x1xi32> to vector<8x128xi32>
    %46 = arith.cmpi eq, %30, %45 : vector<8x128xi32>
    %cst_30 = arith.constant 0.000000e+00 : f32
    %47 = vector.broadcast %cst_30 : f32 to vector<8x128xf32>
    %48 = arith.select %46, %28, %47 : vector<8x128xi1>, vector<8x128xf32>
    %cst_31 = arith.constant dense<0.000000e+00> : vector<8xf32>
    %49 = vector.multi_reduction <add>, %48, %cst_31 [1] : vector<8x128xf32> to vector<8xf32>
    %50 = vector.shape_cast %49 : vector<8xf32> to vector<8x1xf32>
    %51 = arith.subf %43, %50 : vector<8x1xf32>
    %52 = tpu.iota {dimensions = array<i32: 0>} : vector<8x1xi32>
    %c2_i32 = arith.constant 2 : i32
    %53 = vector.broadcast %c2_i32 : i32 to vector<8x1xi32>
    %54 = arith.cmpi slt, %52, %53 : vector<8x1xi32>
    %55 = arith.extui %54 : vector<8x1xi1> to vector<8x1xi32>
    %56 = arith.sitofp %55 : vector<8x1xi32> to vector<8x1xf32>
    %57 = arith.mulf %51, %56 : vector<8x1xf32>
    %58 = vector.shape_cast %57 : vector<8x1xf32> to vector<1x8x1xf32>
    %cst_32 = arith.constant dense<0.000000e+00> : vector<1xf32>
    %59 = vector.multi_reduction <add>, %58, %cst_32 [1, 2] : vector<1x8x1xf32> to vector<1xf32>
    %60 = vector.shape_cast %59 : vector<1xf32> to vector<1x1x1xf32>
    %61 = vector.extract %60[0, 0, 0] : f32 from vector<1x1x1xf32>
    %cst_33 = arith.constant 2.000000e+00 : f32
    %62 = arith.divf %61, %cst_33 : f32
    %63 = vector.broadcast %62 : f32 to vector<1x1xf32>
    %c0_34 = arith.constant 0 : index
    %c0_35 = arith.constant 0 : index
    %64 = vector.load %arg12[%c0_34, %c0_35] : memref<1x1xf32, #tpu.memory_space<vmem>>, vector<1x1xf32>
    tpu.vector_store %arg12[%c0_34, %c0_35], %63 {strides = array<i32>} : memref<1x1xf32, #tpu.memory_space<vmem>>, vector<1x1xf32>,
    return
  }
}

</mosaic_0001>

<llo_original>
// kernel: tpu_custom_call.1
$region0: #{tpu_custom_call.1}
  #allocation0 [shape = 'u32[]', space=smem, size = 0x4, offset = 0x4, fixed_abs, tag = 'smem constant byte address 0x4 - core index']
  #allocation1 [shape = 'u32[144,128]{1,0:T(1,128)}', space=vmem, size = 0x12000, scoped, tag = 'internal scratch']
  %s0 = inlined_call_operand.vmem [shape: bf16[8,224], index: 0, kind: input, shape index: {}]
  %s1 = inlined_call_operand.vmem [shape: bf16[224,64], index: 1, kind: input, shape index: {}]
  %s2 = inlined_call_operand.vmem [shape: f32[1,64], index: 2, kind: input, shape index: {}]
  %s3 = inlined_call_operand.vmem [shape: bf16[64,64], index: 3, kind: input, shape index: {}]
  %s4 = inlined_call_operand.vmem [shape: f32[1,64], index: 4, kind: input, shape index: {}]
  %s5 = inlined_call_operand.vmem [shape: bf16[64,64], index: 5, kind: input, shape index: {}]
  %s6 = inlined_call_operand.vmem [shape: f32[1,64], index: 6, kind: input, shape index: {}]
  %s7 = inlined_call_operand.vmem [shape: f32[8,64], index: 7, kind: input, shape index: {}]
  %s8 = inlined_call_operand.vmem [shape: bf16[64,128], index: 8, kind: input, shape index: {}]
  %s9 = inlined_call_operand.vmem [shape: f32[1,128], index: 9, kind: input, shape index: {}]
  %s10 = inlined_call_operand.vmem [shape: s32[8,1], index: 10, kind: input, shape index: {}]
  %s11 = inlined_call_operand.hbm [shape: f32[8,128], index: 11, kind: output, shape index: {0}]
  %s12 = inlined_call_operand.hbm [shape: f32[1,1], index: 12, kind: output, shape index: {1}]
  %13 = xla_tuple %s11, %s12
  %s14 = sld [smem:[#allocation0]]
  $region62: #{tpu_custom_call.1} parent=0
    _
  %s16 = ssub.s32 1, %s14
  %s17 = scalar_select 0, %s16, %s14
  $region1: #{tpu_custom_call.1} parent=0
    #allocation2 [shape = 'u8[4096]{0}', space=vmem, size = 0x1000, scoped, tag = 'output window, operand 0, single buffered']
    #allocation3 [shape = 's32[1]{0}', space=sflag, size = 0x4, scoped, tag = 'scoped memory for tpu_custom_call.1']
    #allocation4 [shape = 'u8[512]{0}', space=vmem, size = 0x400, scoped, tag = 'output window, operand 1, single buffered']
    #allocation5 [shape = 's32[1]{0}', space=sflag, size = 0x4, scoped, tag = 'scoped memory for tpu_custom_call.1']
    %18 = vsyncpa [#allocation3], 0
    %19 = vsyncpa [#allocation5], 0
    // Predicated region
    $region2: #{tpu_custom_call.1} parent=1 // pred_check
      _
    $region3: #{tpu_custom_call.1} parent=1 // pred_check_branch
      %21 = sbr.rel (0) target = $region5
    $region4: #{tpu_custom_call.1} parent=1 // pred_region
      _
    $region5: #{tpu_custom_call.1} parent=1 // pred_fallthru
      _
    // Predicated region
    $region6: #{tpu_custom_call.1} parent=1 // pred_check
      _
    $region7: #{tpu_custom_call.1} parent=1 // pred_check_branch
      %23 = sbr.rel (0) target = $region9
    $region8: #{tpu_custom_call.1} parent=1 // pred_region
      _
    $region9: #{tpu_custom_call.1} parent=1 // pred_fallthru
      _
    // Predicated region
    $region10: #{tpu_custom_call.1} parent=1 // pred_check
      _
    $region11: #{tpu_custom_call.1} parent=1 // pred_check_branch
      %25 = sbr.rel (0) target = $region13
    $region12: #{tpu_custom_call.1} parent=1 // pred_region
      _
    $region13: #{tpu_custom_call.1} parent=1 // pred_fallthru
      _
    // Predicated region
    $region14: #{tpu_custom_call.1} parent=1 // pred_check
      _
    $region15: #{tpu_custom_call.1} parent=1 // pred_check_branch
      %27 = sbr.rel (0) target = $region17
    $region16: #{tpu_custom_call.1} parent=1 // pred_region
      _
    $region17: #{tpu_custom_call.1} parent=1 // pred_fallthru
      _
    // Predicated region
    $region18: #{tpu_custom_call.1} parent=1 // pred_check
      _
    $region19: #{tpu_custom_call.1} parent=1 // pred_check_branch
      %29 = sbr.rel (0) target = $region21
    $region20: #{tpu_custom_call.1} parent=1 // pred_region
      _
    $region21: #{tpu_custom_call.1} parent=1 // pred_fallthru
      _
    // Predicated region
    $region22: #{tpu_custom_call.1} parent=1 // pred_check
      _
    $region23: #{tpu_custom_call.1} parent=1 // pred_check_branch
      %31 = sbr.rel (0) target = $region25
    $region24: #{tpu_custom_call.1} parent=1 // pred_region
      _
    $region25: #{tpu_custom_call.1} parent=1 // pred_fallthru
      _
    // Predicated region
    $region26: #{tpu_custom_call.1} parent=1 // pred_check
      _
    $region27: #{tpu_custom_call.1} parent=1 // pred_check_branch
      %33 = sbr.rel (0) target = $region29
    $region28: #{tpu_custom_call.1} parent=1 // pred_region
      _
    $region29: #{tpu_custom_call.1} parent=1 // pred_fallthru
      _
    // Predicated region
    $region30: #{tpu_custom_call.1} parent=1 // pred_check
      _
    $region31: #{tpu_custom_call.1} parent=1 // pred_check_branch
      %35 = sbr.rel (0) target = $region33
    $region32: #{tpu_custom_call.1} parent=1 // pred_region
      _
    $region33: #{tpu_custom_call.1} parent=1 // pred_fallthru
      _
    // Predicated region
    $region34: #{tpu_custom_call.1} parent=1 // pred_check
      _
    $region35: #{tpu_custom_call.1} parent=1 // pred_check_branch
      %37 = sbr.rel (0) target = $region37
    $region36: #{tpu_custom_call.1} parent=1 // pred_region
      _
    $region37: #{tpu_custom_call.1} parent=1 // pred_fallthru
      _
    // Predicated region
    $region38: #{tpu_custom_call.1} parent=1 // pred_check
      _
    $region39: #{tpu_custom_call.1} parent=1 // pred_check_branch
      %39 = sbr.rel (0) target = $region41
    $region40: #{tpu_custom_call.1} parent=1 // pred_region
      _
    $region41: #{tpu_custom_call.1} parent=1 // pred_fallthru
      _
    // Predicated region
    $region42: #{tpu_custom_call.1} parent=1 // pred_check
      _
    $region43: #{tpu_custom_call.1} parent=1 // pred_check_branch
      %41 = sbr.rel (0) target = $region45
    $region44: #{tpu_custom_call.1} parent=1 // pred_region
      _
    $region45: #{tpu_custom_call.1} parent=1 // pred_fallthru
      _
    %v43 = vld [vmem:[%s0] sm:$0xff]
    %v44 = vld [vmem:[%s1] sm:$0xf]
    %v45 = vld [vmem:[%s1 + $0x4] sm:$0xf]
    %v46 = vld [vmem:[%s1 + $0x8] sm:$0xf]
    %v47 = vld [vmem:[%s1 + $0xc] sm:$0xf]
    %v48 = vld [vmem:[%s1 + $0x10] sm:$0xf]
    %v49 = vld [vmem:[%s1 + $0x14] sm:$0xf]
    %v50 = vld [vmem:[%s1 + $0x18] sm:$0xf]
    %v51 = vld [vmem:[%s1 + $0x1c] sm:$0xf]
    %v52 = vld [vmem:[%s1 + $0x20] sm:$0xf]
    %v53 = vld [vmem:[%s1 + $0x24] sm:$0xf]
    %v54 = vld [vmem:[%s1 + $0x28] sm:$0xf]
    %v55 = vld [vmem:[%s1 + $0x2c] sm:$0xf]
    %v56 = vld [vmem:[%s1 + $0x30] sm:$0xf]
    %v57 = vld [vmem:[%s1 + $0x34] sm:$0xf]
    %v58 = vld [vmem:[%s1 + $0x38] sm:$0xf]
    %v59 = vld [vmem:[%s1 + $0x3c] sm:$0xf]
    %v60 = vld [vmem:[%s1 + $0x40] sm:$0xf]
    %v61 = vld [vmem:[%s1 + $0x44] sm:$0xf]
    %v62 = vld [vmem:[%s1 + $0x48] sm:$0xf]
    %v63 = vld [vmem:[%s1 + $0x4c] sm:$0xf]
    %v64 = vld [vmem:[%s1 + $0x50] sm:$0xf]
    %v65 = vld [vmem:[%s1 + $0x54] sm:$0xf]
    %v66 = vld [vmem:[%s1 + $0x58] sm:$0xf]
    %v67 = vld [vmem:[%s1 + $0x5c] sm:$0xf]
    %v68 = vld [vmem:[%s1 + $0x60] sm:$0xf]
    %v69 = vld [vmem:[%s1 + $0x64] sm:$0xf]
    %v70 = vld [vmem:[%s1 + $0x68] sm:$0xf]
    %v71 = vld [vmem:[%s1 + $0x6c] sm:$0xf]
    %v72 = vld [vmem:[%s2] sm:$0x1]
    %v74 = vlaneseq
    %v75 = vshrl.u32 %v74, 7
    %v76 = vsub.s32 0, %v75
    %v77 = vrot.slane %v72, %v76
    %v80 = vunpack.c.l.b16 %v43
    %v81 = vunpack.c.h.b16 %v43
    %v82 = vpack.c.b16 %v80, %v80
    %v83 = vpack.c.b16 %v81, %v81
    %v113 = vunpack.c.l.b16 %v44
    %v114 = vunpack.c.l.b16 %v45
    %v115 = vunpack.c.l.b16 %v46
    %v116 = vunpack.c.l.b16 %v47
    %v117 = vunpack.c.l.b16 %v48
    %v118 = vunpack.c.l.b16 %v49
    %v119 = vunpack.c.l.b16 %v50
    %v120 = vunpack.c.l.b16 %v51
    %v121 = vunpack.c.l.b16 %v52
    %v122 = vunpack.c.l.b16 %v53
    %v123 = vunpack.c.l.b16 %v54
    %v124 = vunpack.c.l.b16 %v55
    %v125 = vunpack.c.l.b16 %v56
    %v126 = vunpack.c.l.b16 %v57
    %v127 = vunpack.c.l.b16 %v58
    %v128 = vunpack.c.l.b16 %v59
    %v129 = vunpack.c.l.b16 %v60
    %v130 = vunpack.c.l.b16 %v61
    %v131 = vunpack.c.l.b16 %v62
    %v132 = vunpack.c.l.b16 %v63
    %v133 = vunpack.c.l.b16 %v64
    %v134 = vunpack.c.l.b16 %v65
    %v135 = vunpack.c.l.b16 %v66
    %v136 = vunpack.c.l.b16 %v67
    %v137 = vunpack.c.l.b16 %v68
    %v138 = vunpack.c.l.b16 %v69
    %v139 = vunpack.c.l.b16 %v70
    %v140 = vunpack.c.l.b16 %v71
    %v141 = vpack.c.b16 %v114, %v113
    %v142 = vpack.c.b16 %v116, %v115
    %v143 = vpack.c.b16 %v118, %v117
    %v144 = vpack.c.b16 %v120, %v119
    %v145 = vpack.c.b16 %v122, %v121
    %v146 = vpack.c.b16 %v124, %v123
    %v147 = vpack.c.b16 %v126, %v125
    %v148 = vpack.c.b16 %v128, %v127
    %v149 = vpack.c.b16 %v130, %v129
    %v150 = vpack.c.b16 %v132, %v131
    %v151 = vpack.c.b16 %v134, %v133
    %v152 = vpack.c.b16 %v136, %v135
    %v153 = vpack.c.b16 %v138, %v137
    %v154 = vpack.c.b16 %v140, %v139
    %vm169 = vcmask 785408
    %v171 = vsel %vm169, %v83, 0
    %173 = vmatprep.subr.bf16.mxu0 0
    %174 = vmatpush1.bf16.msra.mxu0 %v148
    %175 = vmatprep.subr.bf16.mxu0 0
    %176 = vmatpush1.bf16.msra.mxu0 %v147
    %177 = vmatprep.subr.bf16.mxu0 0
    %178 = vmatpush1.bf16.msra.mxu0 %v146
    %179 = vmatprep.subr.bf16.mxu0 0
    %180 = vmatpush1.bf16.msra.mxu0 %v145
    %181 = vmatprep.subr.bf16.mxu0 0
    %182 = vmatpush1.bf16.msra.mxu0 %v144
    %183 = vmatprep.subr.bf16.mxu0 0
    %184 = vmatpush1.bf16.msra.mxu0 %v143
    %185 = vmatprep.subr.bf16.mxu0 0
    %186 = vmatpush1.bf16.msra.mxu0 %v142
    %187 = vmatprep.subr.bf16.mxu0 0
    %188 = vmatpush1.bf16.msra.mxu0 %v141
    %189 = vmatprep.subr.bf16.mxu0 0
    %190 = vmatpush2.bf16.msra.mxu0 0
    %191 = vmatprep.subr.bf16.mxu0 0
    %192 = vmatpush2.bf16.msra.mxu0 0
    %193 = vmatprep.subr.bf16.mxu0 0
    %194 = vmatpush2.bf16.msra.mxu0 %v154
    %195 = vmatprep.subr.bf16.mxu0 0
    %196 = vmatpush2.bf16.msra.mxu0 %v153
    %197 = vmatprep.subr.bf16.mxu0 0
    %198 = vmatpush2.bf16.msra.mxu0 %v152
    %199 = vmatprep.subr.bf16.mxu0 0
    %200 = vmatpush2.bf16.msra.mxu0 %v151
    %201 = vmatprep.subr.bf16.mxu0 0
    %202 = vmatpush2.bf16.msra.mxu0 %v150
    %203 = vmatprep.subr.bf16.mxu0 0
    %204 = vmatpush2.bf16.msra.mxu0 %v149
    %205 = vmatprep.mubr.bf16.mxu0 %v171
    %206 = vmatmul.mubr.bf16.gmra.mxu0 %v82
    %v207 = vpop.f32.mrf.mxu0
    %v208 = vadd.f32 %v77, %v207
    %v209 = vpop.f32.mrf.mxu0
    %v210 = vpop.f32.mrf.mxu0
    %v211 = vpop.f32.mrf.mxu0
    %212 = vdwg.mxu0
    %v213 = vpack.c.bf16 %v208, %v208
    %v214 = vld [vmem:[%s3] sm:$0xf]
    %v215 = vld [vmem:[%s3 + $0x4] sm:$0xf]
    %v216 = vld [vmem:[%s3 + $0x8] sm:$0xf]
    %v217 = vld [vmem:[%s3 + $0xc] sm:$0xf]
    %v218 = vld [vmem:[%s3 + $0x10] sm:$0xf]
    %v219 = vld [vmem:[%s3 + $0x14] sm:$0xf]
    %v220 = vld [vmem:[%s3 + $0x18] sm:$0xf]
    %v221 = vld [vmem:[%s3 + $0x1c] sm:$0xf]
    %v222 = vld [vmem:[%s4] sm:$0x1]
    %v224 = vlaneseq
    %v225 = vshrl.u32 %v224, 7
    %v226 = vsub.s32 0, %v225
    %v227 = vrot.slane %v222, %v226
    %v237 = vunpack.c.l.b16 %v214
    %v238 = vunpack.c.l.b16 %v215
    %v239 = vunpack.c.l.b16 %v216
    %v240 = vunpack.c.l.b16 %v217
    %v241 = vunpack.c.l.b16 %v218
    %v242 = vunpack.c.l.b16 %v219
    %v243 = vunpack.c.l.b16 %v220
    %v244 = vunpack.c.l.b16 %v221
    %v245 = vpack.c.b16 %v238, %v237
    %v246 = vpack.c.b16 %v240, %v239
    %v247 = vpack.c.b16 %v242, %v241
    %v248 = vpack.c.b16 %v244, %v243
    %vm253 = vcmask 523264
    %v255 = vsel %vm253, %v213, 0
    %257 = vmatprep.subr.bf16.mxu0 0
    %258 = vmatpush1.bf16.msra.mxu0 0
    %259 = vmatprep.subr.bf16.mxu0 0
    %260 = vmatpush1.bf16.msra.mxu0 0
    %261 = vmatprep.subr.bf16.mxu0 0
    %262 = vmatpush1.bf16.msra.mxu0 0
    %263 = vmatprep.subr.bf16.mxu0 0
    %264 = vmatpush1.bf16.msra.mxu0 0
    %265 = vmatprep.subr.bf16.mxu0 0
    %266 = vmatpush1.bf16.msra.mxu0 %v248
    %267 = vmatprep.subr.bf16.mxu0 0
    %268 = vmatpush1.bf16.msra.mxu0 %v247
    %269 = vmatprep.subr.bf16.mxu0 0
    %270 = vmatpush1.bf16.msra.mxu0 %v246
    %271 = vmatprep.subr.bf16.mxu0 0
    %272 = vmatpush1.bf16.msra.mxu0 %v245
    %273 = vmatprep.subr.bf16.mxu0 0
    %274 = vmatpush2.bf16.msra.mxu0 0
    %275 = vmatprep.subr.bf16.mxu0 0
    %276 = vmatpush2.bf16.msra.mxu0 0
    %277 = vmatprep.subr.bf16.mxu0 0
    %278 = vmatpush2.bf16.msra.mxu0 0
    %279 = vmatprep.subr.bf16.mxu0 0
    %280 = vmatpush2.bf16.msra.mxu0 0
    %281 = vmatprep.subr.bf16.mxu0 0
    %282 = vmatpush2.bf16.msra.mxu0 0
    %283 = vmatprep.subr.bf16.mxu0 0
    %284 = vmatpush2.bf16.msra.mxu0 0
    %285 = vmatprep.subr.bf16.mxu0 0
    %286 = vmatpush2.bf16.msra.mxu0 0
    %287 = vmatprep.subr.bf16.mxu0 0
    %288 = vmatpush2.bf16.msra.mxu0 0
    %289 = vmatprep.mubr.bf16.mxu0 0
    %290 = vmatmul.mubr.bf16.gmra.mxu0 %v255
    %v291 = vpop.f32.mrf.mxu0
    %v292 = vadd.f32 %v227, %v291
    %v293 = vpop.f32.mrf.mxu0
    %v294 = vpop.f32.mrf.mxu0
    %v295 = vpop.f32.mrf.mxu0
    %296 = vdwg.mxu0
    %v297 = vtanh.pop %v292
    %v298 = vpack.c.bf16 %v297, %v297
    %v299 = vld [vmem:[%s5] sm:$0xf]
    %v300 = vld [vmem:[%s5 + $0x4] sm:$0xf]
    %v301 = vld [vmem:[%s5 + $0x8] sm:$0xf]
    %v302 = vld [vmem:[%s5 + $0xc] sm:$0xf]
    %v303 = vld [vmem:[%s5 + $0x10] sm:$0xf]
    %v304 = vld [vmem:[%s5 + $0x14] sm:$0xf]
    %v305 = vld [vmem:[%s5 + $0x18] sm:$0xf]
    %v306 = vld [vmem:[%s5 + $0x1c] sm:$0xf]
    %v307 = vld [vmem:[%s6] sm:$0x1]
    %v309 = vlaneseq
    %v310 = vshrl.u32 %v309, 7
    %v311 = vsub.s32 0, %v310
    %v312 = vrot.slane %v307, %v311
    %v322 = vunpack.c.l.b16 %v299
    %v323 = vunpack.c.l.b16 %v300
    %v324 = vunpack.c.l.b16 %v301
    %v325 = vunpack.c.l.b16 %v302
    %v326 = vunpack.c.l.b16 %v303
    %v327 = vunpack.c.l.b16 %v304
    %v328 = vunpack.c.l.b16 %v305
    %v329 = vunpack.c.l.b16 %v306
    %v330 = vpack.c.b16 %v323, %v322
    %v331 = vpack.c.b16 %v325, %v324
    %v332 = vpack.c.b16 %v327, %v326
    %v333 = vpack.c.b16 %v329, %v328
    %v339 = vsel %vm253, %v298, 0
    %341 = vmatprep.subr.bf16.mxu0 0
    %342 = vmatpush1.bf16.msra.mxu0 0
    %343 = vmatprep.subr.bf16.mxu0 0
    %344 = vmatpush1.bf16.msra.mxu0 0
    %345 = vmatprep.subr.bf16.mxu0 0
    %346 = vmatpush1.bf16.msra.mxu0 0
    %347 = vmatprep.subr.bf16.mxu0 0
    %348 = vmatpush1.bf16.msra.mxu0 0
    %349 = vmatprep.subr.bf16.mxu0 0
    %350 = vmatpush1.bf16.msra.mxu0 %v333
    %351 = vmatprep.subr.bf16.mxu0 0
    %352 = vmatpush1.bf16.msra.mxu0 %v332
    %353 = vmatprep.subr.bf16.mxu0 0
    %354 = vmatpush1.bf16.msra.mxu0 %v331
    %355 = vmatprep.subr.bf16.mxu0 0
    %356 = vmatpush1.bf16.msra.mxu0 %v330
    %357 = vmatprep.subr.bf16.mxu0 0
    %358 = vmatpush2.bf16.msra.mxu0 0
    %359 = vmatprep.subr.bf16.mxu0 0
    %360 = vmatpush2.bf16.msra.mxu0 0
    %361 = vmatprep.subr.bf16.mxu0 0
    %362 = vmatpush2.bf16.msra.mxu0 0
    %363 = vmatprep.subr.bf16.mxu0 0
    %364 = vmatpush2.bf16.msra.mxu0 0
    %365 = vmatprep.subr.bf16.mxu0 0
    %366 = vmatpush2.bf16.msra.mxu0 0
    %367 = vmatprep.subr.bf16.mxu0 0
    %368 = vmatpush2.bf16.msra.mxu0 0
    %369 = vmatprep.subr.bf16.mxu0 0
    %370 = vmatpush2.bf16.msra.mxu0 0
    %371 = vmatprep.subr.bf16.mxu0 0
    %372 = vmatpush2.bf16.msra.mxu0 0
    %373 = vmatprep.mubr.bf16.mxu0 0
    %374 = vmatmul.mubr.bf16.gmra.mxu0 %v339
    %v375 = vpop.f32.mrf.mxu0
    %v376 = vadd.f32 %v312, %v375
    %v377 = vpop.f32.mrf.mxu0
    %v378 = vpop.f32.mrf.mxu0
    %v379 = vpop.f32.mrf.mxu0
    %380 = vdwg.mxu0
    %v381 = vmax.f32 %v376, 0.0
    %v382 = vld [vmem:[%s7] sm:$0xff]
    %v383 = vmul.f32 %v381, %v382
    %v384 = vpack.c.bf16 %v383, %v383
    %v385 = vld [vmem:[%s8] sm:$0xf]
    %v386 = vld [vmem:[%s8 + $0x4] sm:$0xf]
    %v387 = vld [vmem:[%s8 + $0x8] sm:$0xf]
    %v388 = vld [vmem:[%s8 + $0xc] sm:$0xf]
    %v389 = vld [vmem:[%s8 + $0x10] sm:$0xf]
    %v390 = vld [vmem:[%s8 + $0x14] sm:$0xf]
    %v391 = vld [vmem:[%s8 + $0x18] sm:$0xf]
    %v392 = vld [vmem:[%s8 + $0x1c] sm:$0xf]
    %v393 = vld [vmem:[%s9] sm:$0x1]
    %v395 = vlaneseq
    %v396 = vshrl.u32 %v395, 7
    %v397 = vsub.s32 0, %v396
    %v398 = vrot.slane %v393, %v397
    %v408 = vunpack.c.l.b16 %v385
    %v409 = vunpack.c.l.b16 %v386
    %v410 = vunpack.c.l.b16 %v387
    %v411 = vunpack.c.l.b16 %v388
    %v412 = vunpack.c.l.b16 %v389
    %v413 = vunpack.c.l.b16 %v390
    %v414 = vunpack.c.l.b16 %v391
    %v415 = vunpack.c.l.b16 %v392
    %v416 = vpack.c.b16 %v409, %v408
    %v417 = vpack.c.b16 %v411, %v410
    %v418 = vpack.c.b16 %v413, %v412
    %v419 = vpack.c.b16 %v415, %v414
    %v425 = vsel %vm253, %v384, 0
    %427 = vmatprep.subr.bf16.mxu0 0
    %428 = vmatpush1.bf16.msra.mxu0 0
    %429 = vmatprep.subr.bf16.mxu0 0
    %430 = vmatpush1.bf16.msra.mxu0 0
    %431 = vmatprep.subr.bf16.mxu0 0
    %432 = vmatpush1.bf16.msra.mxu0 0
    %433 = vmatprep.subr.bf16.mxu0 0
    %434 = vmatpush1.bf16.msra.mxu0 0
    %435 = vmatprep.subr.bf16.mxu0 0
    %436 = vmatpush1.bf16.msra.mxu0 %v419
    %437 = vmatprep.subr.bf16.mxu0 0
    %438 = vmatpush1.bf16.msra.mxu0 %v418
    %439 = vmatprep.subr.bf16.mxu0 0
    %440 = vmatpush1.bf16.msra.mxu0 %v417
    %441 = vmatprep.subr.bf16.mxu0 0
    %442 = vmatpush1.bf16.msra.mxu0 %v416
    %443 = vmatprep.subr.bf16.mxu0 0
    %444 = vmatpush2.bf16.msra.mxu0 0
    %445 = vmatprep.subr.bf16.mxu0 0
    %446 = vmatpush2.bf16.msra.mxu0 0
    %447 = vmatprep.subr.bf16.mxu0 0
    %448 = vmatpush2.bf16.msra.mxu0 0
    %449 = vmatprep.subr.bf16.mxu0 0
    %450 = vmatpush2.bf16.msra.mxu0 0
    %451 = vmatprep.subr.bf16.mxu0 0
    %452 = vmatpush2.bf16.msra.mxu0 0
    %453 = vmatprep.subr.bf16.mxu0 0
    %454 = vmatpush2.bf16.msra.mxu0 0
    %455 = vmatprep.subr.bf16.mxu0 0
    %456 = vmatpush2.bf16.msra.mxu0 0
    %457 = vmatprep.subr.bf16.mxu0 0
    %458 = vmatpush2.bf16.msra.mxu0 0
    %459 = vmatprep.mubr.bf16.mxu0 0
    %460 = vmatmul.mubr.bf16.gmra.mxu0 %v425
    %v461 = vpop.f32.mrf.mxu0
    %v462 = vadd.f32 %v398, %v461
    %v463 = vpop.f32.mrf.mxu0
    %v464 = vpop.f32.mrf.mxu0
    %v465 = vpop.f32.mrf.mxu0
    %466 = vdwg.mxu0
    %467 = vst [vmem:[#allocation2] sm:$0xff] %v462
    %v468 = vlaneseq
    %v469 = vand.u32 %v468, 127
    %vm470 = vcmp.lt.s32.totalorder %v469, 8
    %v471 = vsel %vm470, %v462, -1e+30
    %472 = vmax.xlane.f32.xlu0 %v471
    %v473 = vpop.xlane.xlu0 %472
    %v474 = vsub.f32 %v471, %v473
    %v475 = vmul.f32 %v474, 1.442695
    %v476 = vpow.pop %v475
    %477 = vadd.xlane.f32.xlu0 %v476
    %v478 = vpop.xlane.xlu0 %477
    %v479 = vlog2.pop %v478
    %v480 = vmul.f32 %v479, 0.6931472
    %v481 = vadd.f32 %v473, %v480
    %v482 = vld [vmem:[%s10] sm:$0xff]
    %483 = vset.pattern.permute.xlu0 0
    %484 = vperm.xlu0 %483, %v482
    %v485 = vpop.permute.xlu0 %484
    %vm486 = vcmp.eq.s32.totalorder %v469, %v485
    %v487 = vsel %vm486, %v462, 0.0
    %488 = vadd.xlane.f32.xlu0 %v487
    %v489 = vpop.xlane.xlu0 %488
    %v490 = vsub.f32 %v481, %v489
    %v491 = vlaneseq
    %v492 = vshrl.u32 %v491, 7
    %vm493 = vcmp.lt.s32.totalorder %v492, 2
    %v494 = vsel %vm493, 1, 0
    %v495 = vcvt.s32.f32 %v494
    %v496 = vmul.f32 %v490, %v495
    %vm497 = vcmask 7168
    %v498 = vsel %vm497, %v496, 0.0
    %499 = vadd.xlane.f32.xlu0 %v498
    %v500 = vpop.xlane.xlu0 %499
    %v501 = vrot.slane %v500, 4
    %v502 = vadd.f32 %v500, %v501
    %v503 = vrot.slane %v502, 2
    %v504 = vadd.f32 %v502, %v503
    %v505 = vrot.slane %v504, 1
    %v506 = vadd.f32 %v504, %v505
    %s507 = vtos %v506
    %v508 = vrcp.pop 2.0
    %s509 = vtos %v508
    %s510 = smul.f32 %s507, %s509
    %v511 = vstv %s510
    %vm512 = vcmask 0
    %513 = vst.msk [vmem:[#allocation4] sm:$0x1] %vm512, %v511
    // Predicated region
    $region46: #{tpu_custom_call.1} parent=1 // pred_check
      _
    $region47: #{tpu_custom_call.1} parent=1 // pred_check_branch
      %515 = sbr.rel (0) target = $region49
    $region48: #{tpu_custom_call.1} parent=1 // pred_region
      %s517 = ssub.s32 128, 128
      %518 = vsyncadd [#allocation3], %s517
      %s520 = sshll.u32 [#allocation2], 4
      %s521 = int_to_ptr.vmem [resolvable:$true] %s520
      %523 = dma.vmem_to_hbm [thread:$0]  %s521, 128, %s11, [#allocation3]
    $region49: #{tpu_custom_call.1} parent=1 // pred_fallthru
      _
    // Predicated region
    $region50: #{tpu_custom_call.1} parent=1 // pred_check
      _
    $region51: #{tpu_custom_call.1} parent=1 // pred_check_branch
      %525 = sbr.rel (0) target = $region53
    $region52: #{tpu_custom_call.1} parent=1 // pred_region
      %s527 = ssub.s32 16, 16
      %528 = vsyncadd [#allocation5], %s527
      %s530 = sshll.u32 [#allocation4], 4
      %s531 = int_to_ptr.vmem [resolvable:$true] %s530
      %533 = dma.vmem_to_hbm [thread:$0]  %s531, 16, %s12, [#allocation5]
    $region53: #{tpu_custom_call.1} parent=1 // pred_fallthru
      _
    // Predicated region
    $region54: #{tpu_custom_call.1} parent=1 // pred_check
      _
    $region55: #{tpu_custom_call.1} parent=1 // pred_check_branch
      %535 = sbr.rel (0) target = $region57
    $region56: #{tpu_custom_call.1} parent=1 // pred_region
      %536 = dma.done [#allocation3], 128
    $region57: #{tpu_custom_call.1} parent=1 // pred_fallthru
      _
    // Predicated region
    $region58: #{tpu_custom_call.1} parent=1 // pred_check
      _
    $region59: #{tpu_custom_call.1} parent=1 // pred_check_branch
      %538 = sbr.rel (0) target = $region61
    $region60: #{tpu_custom_call.1} parent=1 // pred_region
      %539 = dma.done [#allocation5], 16
    $region61: #{tpu_custom_call.1} parent=1 // pred_fallthru
      _
    %540 = vsyncpa [#allocation3], 1
    %541 = vsyncpa [#allocation5], 1

</llo_original>
